<compile_context>
chip_gen: v5e
topology: v5e:2x2
jax: 0.10.0
libtpu: 0.0.40
codegen_flags: <defaults>
</compile_context>

<pallas_src>
import functools

import jax
import jax.numpy as jnp
from jax.experimental import pallas as pl
from jax.experimental.pallas import tpu as pltpu


def _ls_loss_kernel(pred_ref, tgt_ref, out_ref, m_ref, l_ref, ws_ref, *,
                    smoothing, ignore_index, vocab, block_v, ragged):
    """Process one (TM, TV) logits chunk of one row block.

    pred_ref: (TM, TV) logits (native dtype)   tgt_ref: (TM, 1) int32
    out_ref : (1, 1, 1) f32 per-row-block loss sum
    m_ref / l_ref / ws_ref: (TM, 1) f32 running max / sum-exp / weighted-sum.

    NOTE: rows past the true N in the (partially out-of-bounds) last row block
    carry unspecified data.  That is safe ONLY because every reduction over
    raw data here is strictly per-row and those rows are masked (their target
    is padded to ignore_index) before the final cross-row sum.  Do not add any
    cross-row reduction over raw logits without revisiting this.
    """
    j = pl.program_id(1)
    nv = pl.num_programs(1)

    @pl.when(j == 0)
    def _init():
        m_ref[...] = jnp.full_like(m_ref, -jnp.inf)
        l_ref[...] = jnp.zeros_like(l_ref)
        ws_ref[...] = jnp.zeros_like(ws_ref)

    x = pred_ref[...]                                      # (TM, TV)
    # bf16 stays bf16 on the wide elementwise path (v6e/v7x bf16 VPU/EUP);
    # other dtypes are promoted to f32.  All reductions accumulate in f32.
    if not (x.dtype == jnp.bfloat16 or x.dtype == jnp.float32):
        x = x.astype(jnp.float32)
    dt = x.dtype
    tgt = tgt_ref[...]                                     # (TM, 1) int32

    # Global vocab index of every lane of this chunk.
    col = jax.lax.broadcasted_iota(jnp.int32, x.shape, 1) + j * block_v

    eps = smoothing / (vocab - 1)
    confidence = 1.0 - smoothing

    if ragged:
        # Last vocab chunk reads past V: neutralize out-of-range lanes.
        in_range = col < vocab
        x_w = jnp.where(in_range, x, jnp.zeros((), dt))        # 0 for weighted sum
        x_lse = jnp.where(in_range, x, jnp.asarray(-jnp.inf, dt))
    else:
        x_w = x
        x_lse = x

    # Fused weighted reduction: loss_row = logZ - sum_v w_v * x_v with
    # w_v = eps + (confidence - eps)*[v == target]; weights sum to exactly 1.
    w = jnp.where(col == tgt, jnp.asarray(confidence, dt), jnp.asarray(eps, dt))
    ws_ref[...] += jnp.sum(w * x_w, axis=-1, keepdims=True, dtype=jnp.float32)

    # Online (flash-style) log-sum-exp over vocab chunks.  blk_max is computed
    # in dt so the f32 running max always holds dt-exact values; the cast back
    # to dt below is therefore lossless (exp() and the final logZ stay
    # consistent even for bf16 inputs).
    blk_max = jnp.max(x_lse, axis=-1, keepdims=True)               # (TM, 1) dt
    m_prev = m_ref[...]
    m_new = jnp.maximum(m_prev, blk_max.astype(jnp.float32))       # (TM, 1) f32
    p = jnp.exp(x_lse - m_new.astype(dt))                          # (TM, TV) dt
    alpha = jnp.exp(m_prev - m_new)                                # (TM, 1) f32
    l_ref[...] = alpha * l_ref[...] + jnp.sum(p, axis=-1, keepdims=True,
                                              dtype=jnp.float32)
    m_ref[...] = m_new

    @pl.when(j == nv - 1)
    def _finalize():
        log_z = m_ref[...] + jnp.log(l_ref[...])                   # (TM, 1)
        row_loss = log_z - ws_ref[...]                             # (TM, 1)
        valid = tgt != ignore_index
        # where() also neutralizes NaN/garbage from OOB tail rows.
        masked = jnp.where(valid, row_loss, 0.0)
        out_ref[...] = jnp.sum(masked, axis=0, keepdims=True)[None]   # (1,1,1)


def _round_down(x, m):
    return (x // m) * m


def _vmem_limit_bytes():
    cap = 64 * 1024 * 1024          # v7x floor: 64 MiB per TensorCore
    try:
        info = pltpu.get_tpu_info()
        cap = int(getattr(info, "vmem_capacity_bytes", cap))
    except Exception:
        pass
    # ~75% of physical: 48 MiB on v7x, 96 MiB on v5e/v6e.
    return min(int(cap * 0.75), 96 * 1024 * 1024)


def _choose_tiles(n_rows, vocab, itemsize, vmem_limit):
    """Pick (TM rows, TV vocab lanes, n_vocab_blocks)."""
    # Sub-32-bit dtypes pack along sublanes: 8 (f32) / 16 (bf16) / 32 (int8/fp8).
    row_pack = {1: 32, 2: 16}.get(itemsize, 8)
    budget = int(0.45 * vmem_limit)     # headroom for Mosaic temporaries/spill

    def rows_for(tv):
        # per-row bytes: double-buffered pred chunk + ~3 chunk-wide temporaries
        # in the compute dtype (iota/select/product) + lane-padded (x,128)
        # int32 target block (x2 buffers) and three f32 scratch accumulators.
        wide = tv * (2 * itemsize + 3 * max(itemsize, 2))
        narrow = (2 + 3) * 128 * 4
        return max(row_pack, budget // (wide + narrow))

    tm_full = rows_for(vocab)
    if vocab <= 2048 or tm_full >= 256:
        tv, n_v, tm = vocab, 1, tm_full          # single full-vocab pass
    else:
        tv = 2048                                # chunked online-LSE pass
        n_v = pl.cdiv(vocab, tv)
        tm = rows_for(tv)

    tm = _round_down(min(tm, 8192), row_pack)    # cap raised from 2048
    tm = min(tm, max(row_pack, _round_down(n_rows, row_pack)))
    tm = max(tm, row_pack)
    # Keep >= 2 row blocks when possible so both v7x TensorCores get work.
    if tm >= n_rows and n_rows >= 2 * row_pack:
        tm = max(row_pack, _round_down((n_rows + 1) // 2, row_pack))
    return tm, tv, n_v


def label_smoothing_loss(pred, target, smoothing=0.1, ignore_index=-100,
                         *, block_rows=None, block_vocab=None):
    """pred: (B, S, V) float logits; target: (B, S) int indices."""
    B, S, V = pred.shape
    N = B * S
    itemsize = jnp.dtype(pred.dtype).itemsize

    vmem_limit = _vmem_limit_bytes()
    TM, TV, n_v = _choose_tiles(N, V, itemsize, vmem_limit)
    if block_vocab is not None:          # test/override hook
        TV = min(block_vocab, V)
        n_v = pl.cdiv(V, TV)
    if block_rows is not None:
        TM = block_rows
    ragged = (V % TV) != 0

    pred2 = pred.reshape(N, V)                       # no copy, native dtype
    tgt2 = target.reshape(N, 1).astype(jnp.int32)

    n_blocks = pl.cdiv(N, TM)
    n_rows_pad = n_blocks * TM
    # Only the tiny target vector is padded (ignore_index => tail rows mask to 0).
    if n_rows_pad > N:
        tgt2 = jnp.pad(tgt2, ((0, n_rows_pad - N), (0, 0)),
                       constant_values=ignore_index)
    if N < TM:
        # Degenerate tiny-N case: make the single row block fully in-bounds.
        pred2 = jnp.pad(pred2, ((0, TM - N), (0, 0)))

    kernel = functools.partial(
        _ls_loss_kernel, smoothing=smoothing, ignore_index=ignore_index,
        vocab=V, block_v=TV, ragged=ragged)

    cost = pl.CostEstimate(
        flops=int(6 * N * V),
        transcendentals=int(N * V + 2 * N * n_v),
        bytes_accessed=int(N * V * itemsize + n_rows_pad * 4 + n_blocks * 4),
    )

    block_sums = pl.pallas_call(
        kernel,
        out_shape=jax.ShapeDtypeStruct((n_blocks, 1, 1), jnp.float32),
        grid_spec=pltpu.PrefetchScalarGridSpec(
            num_scalar_prefetch=0,
            grid=(n_blocks, n_v),
            in_specs=[
                pl.BlockSpec((TM, TV), lambda i, j: (i, j)),
                pl.BlockSpec((TM, 1), lambda i, j: (i, 0)),
            ],
            out_specs=pl.BlockSpec((1, 1, 1), lambda i, j: (i, 0, 0)),
            scratch_shapes=[pltpu.VMEM((TM, 1), jnp.float32)] * 3,
        ),
        compiler_params=pltpu.CompilerParams(
            dimension_semantics=("parallel", "arbitrary"),
            vmem_limit_bytes=vmem_limit,
        ),
        cost_estimate=cost,
    )(pred2, tgt2)

    loss_sum = jnp.sum(block_sums)
    valid_count = jnp.sum((target != ignore_index).astype(jnp.float32))
    # NOTE: if every target equals ignore_index this is NaN (0/0), matching the
    # PyTorch reference behaviour.
    return loss_sum / valid_count


def _reference(pred, target, smoothing=0.1, ignore_index=-100):
    V = pred.shape[-1]
    logp = jax.nn.log_softmax(pred.astype(jnp.float32), axis=-1)
    eps = smoothing / (V - 1)
    confidence = 1.0 - smoothing
    onehot = jax.nn.one_hot(target, V, dtype=logp.dtype)
    true_dist = jnp.where(onehot > 0, confidence, eps)
    valid = (target != ignore_index)
    true_dist = jnp.where(valid[..., None], true_dist, 0.0)
    loss = -jnp.sum(true_dist * logp, axis=-1)
    vmask = valid.astype(logp.dtype)
    return jnp.sum(loss * vmask) / jnp.sum(vmask)


if __name__ == "__main__":
    key = jax.random.PRNGKey(0)
    k1, k2, k3, k4 = jax.random.split(key, 4)

    # Test 1: small vocab, single-pass path.
    B, S, V = 2, 8, 32
    pred = jax.random.normal(k1, (B, S, V), dtype=jnp.float32)
    target = jax.random.randint(k2, (B, S), 0, V, dtype=jnp.int32)
    target = target.at[0, 3].set(-100).at[1, 7].set(-100)
    loss = jax.block_until_ready(label_smoothing_loss(pred, target))
    ref = _reference(pred, target)
    assert jnp.allclose(loss, ref, atol=1e-4, rtol=1e-4), (loss, ref)

    # Test 2: forced vocab chunking (online-LSE path) with a ragged last chunk.
    V2 = 320
    pred2 = jax.random.normal(k3, (B, S, V2), dtype=jnp.float32)
    target2 = jax.random.randint(k4, (B, S), 0, V2, dtype=jnp.int32)
    target2 = target2.at[1, 0].set(-100)
    loss2 = jax.block_until_ready(
        label_smoothing_loss(pred2, target2, block_vocab=128))
    ref2 = _reference(pred2, target2)
    assert jnp.allclose(loss2, ref2, atol=1e-4, rtol=1e-4), (loss2, ref2)

    print("KERNEL_OK")
</pallas_src>

<mosaic_0001>
module attributes {stable_mosaic.version = 11 : i64} {
  func.func @_ls_loss_kernel(%arg0: i32, %arg1: i32, %arg2: memref<8x32xf32, #tpu.memory_space<vmem>>, %arg3: memref<8x1xi32, #tpu.memory_space<vmem>>, %arg4: memref<1x1x1xf32, #tpu.memory_space<vmem>>, %arg5: memref<8x1xf32, #tpu.memory_space<vmem>>, %arg6: memref<8x1xf32, #tpu.memory_space<vmem>>, %arg7: memref<8x1xf32, #tpu.memory_space<vmem>>) attributes {dimension_semantics = [#tpu.dimension_semantics<parallel>, #tpu.dimension_semantics<arbitrary>], iteration_bounds = array<i64: 2, 1>, scalar_prefetch = 0 : i64, scratch_operands = 3 : i64, tpu.core_type = #tpu.core_type<tc>, window_params = [{transform_indices = @transform_0, window_bounds = array<i64: 8, 32>}, {transform_indices = @transform_1, window_bounds = array<i64: 8, 1>}, {transform_indices = @transform_2, window_bounds = array<i64: 1, 1, 1>}]} {
    %c0_i32 = arith.constant 0 : i32
    %0 = arith.cmpi eq, %arg1, %c0_i32 : i32
    %1 = arith.extui %0 : i1 to i32
    %c0_i32_0 = arith.constant 0 : i32
    %2 = arith.cmpi ne, %1, %c0_i32_0 : i32
    scf.if %2 {
      %cst_22 = arith.constant 0xFF800000 : f32
      %39 = vector.broadcast %cst_22 : f32 to vector<8x1xf32>
      %c0_23 = arith.constant 0 : index
      %c0_24 = arith.constant 0 : index
      %40 = vector.load %arg5[%c0_23, %c0_24] : memref<8x1xf32, #tpu.memory_space<vmem>>, vector<8x1xf32>
      tpu.vector_store %arg5[%c0_23, %c0_24], %39 {strides = array<i32>} : memref<8x1xf32, #tpu.memory_space<vmem>>, vector<8x1xf32>,
      %cst_25 = arith.constant 0.000000e+00 : f32
      %41 = vector.broadcast %cst_25 : f32 to vector<8x1xf32>
      %c0_26 = arith.constant 0 : index
      %c0_27 = arith.constant 0 : index
      %42 = vector.load %arg6[%c0_26, %c0_27] : memref<8x1xf32, #tpu.memory_space<vmem>>, vector<8x1xf32>
      tpu.vector_store %arg6[%c0_26, %c0_27], %41 {strides = array<i32>} : memref<8x1xf32, #tpu.memory_space<vmem>>, vector<8x1xf32>,
      %cst_28 = arith.constant 0.000000e+00 : f32
      %43 = vector.broadcast %cst_28 : f32 to vector<8x1xf32>
      %c0_29 = arith.constant 0 : index
      %c0_30 = arith.constant 0 : index
      %44 = vector.load %arg7[%c0_29, %c0_30] : memref<8x1xf32, #tpu.memory_space<vmem>>, vector<8x1xf32>
      tpu.vector_store %arg7[%c0_29, %c0_30], %43 {strides = array<i32>} : memref<8x1xf32, #tpu.memory_space<vmem>>, vector<8x1xf32>,
    } else {
    }
    %c0 = arith.constant 0 : index
    %c0_1 = arith.constant 0 : index
    %3 = vector.load %arg2[%c0, %c0_1] : memref<8x32xf32, #tpu.memory_space<vmem>>, vector<8x32xf32>
    %c0_2 = arith.constant 0 : index
    %c0_3 = arith.constant 0 : index
    %4 = vector.load %arg3[%c0_2, %c0_3] : memref<8x1xi32, #tpu.memory_space<vmem>>, vector<8x1xi32>
    %5 = tpu.iota {dimensions = array<i32: 1>} : vector<8x32xi32>
    %c32_i32 = arith.constant 32 : i32
    %6 = arith.muli %arg1, %c32_i32 : i32
    %7 = vector.broadcast %6 : i32 to vector<8x32xi32>
    %8 = arith.addi %5, %7 : vector<8x32xi32>
    %9 = vector.broadcast %4 : vector<8x1xi32> to vector<8x32xi32>
    %10 = arith.cmpi eq, %8, %9 : vector<8x32xi32>
    %cst = arith.constant 0.899999976 : f32
    %cst_4 = arith.constant 0.0032258064 : f32
    %11 = vector.broadcast %cst : f32 to vector<8x32xf32>
    %12 = vector.broadcast %cst_4 : f32 to vector<8x32xf32>
    %13 = arith.select %10, %11, %12 : vector<8x32xi1>, vector<8x32xf32>
    %c0_5 = arith.constant 0 : index
    %c0_6 = arith.constant 0 : index
    %14 = vector.load %arg7[%c0_5, %c0_6] : memref<8x1xf32, #tpu.memory_space<vmem>>, vector<8x1xf32>
    %15 = arith.mulf %13, %3 : vector<8x32xf32>
    %cst_7 = arith.constant dense<0.000000e+00> : vector<8xf32>
    %16 = vector.multi_reduction <add>, %15, %cst_7 [1] : vector<8x32xf32> to vector<8xf32>
    %17 = vector.shape_cast %16 : vector<8xf32> to vector<8x1xf32>
    %18 = arith.addf %14, %17 : vector<8x1xf32>
    %c0_8 = arith.constant 0 : index
    %c0_9 = arith.constant 0 : index
    %19 = vector.load %arg7[%c0_8, %c0_9] : memref<8x1xf32, #tpu.memory_space<vmem>>, vector<8x1xf32>
    tpu.vector_store %arg7[%c0_8, %c0_9], %18 {strides = array<i32>} : memref<8x1xf32, #tpu.memory_space<vmem>>, vector<8x1xf32>,
    %cst_10 = arith.constant dense<0xFF800000> : vector<8xf32>
    %20 = vector.multi_reduction <maximumf>, %3, %cst_10 [1] : vector<8x32xf32> to vector<8xf32>
    %21 = vector.shape_cast %20 : vector<8xf32> to vector<8x1xf32>
    %c0_11 = arith.constant 0 : index
    %c0_12 = arith.constant 0 : index
    %22 = vector.load %arg5[%c0_11, %c0_12] : memref<8x1xf32, #tpu.memory_space<vmem>>, vector<8x1xf32>
    %23 = arith.maximumf %22, %21 : vector<8x1xf32>
    %24 = vector.broadcast %23 : vector<8x1xf32> to vector<8x32xf32>
    %25 = arith.subf %3, %24 : vector<8x32xf32>
    %26 = math.exp %25 : vector<8x32xf32>
    %27 = arith.subf %22, %23 : vector<8x1xf32>
    %28 = math.exp %27 : vector<8x1xf32>
    %c0_13 = arith.constant 0 : index
    %c0_14 = arith.constant 0 : index
    %29 = vector.load %arg6[%c0_13, %c0_14] : memref<8x1xf32, #tpu.memory_space<vmem>>, vector<8x1xf32>
    %30 = arith.mulf %28, %29 : vector<8x1xf32>
    %cst_15 = arith.constant dense<0.000000e+00> : vector<8xf32>
    %31 = vector.multi_reduction <add>, %26, %cst_15 [1] : vector<8x32xf32> to vector<8xf32>
    %32 = vector.shape_cast %31 : vector<8xf32> to vector<8x1xf32>
    %33 = arith.addf %30, %32 : vector<8x1xf32>
    %c0_16 = arith.constant 0 : index
    %c0_17 = arith.constant 0 : index
    %34 = vector.load %arg6[%c0_16, %c0_17] : memref<8x1xf32, #tpu.memory_space<vmem>>, vector<8x1xf32>
    tpu.vector_store %arg6[%c0_16, %c0_17], %33 {strides = array<i32>} : memref<8x1xf32, #tpu.memory_space<vmem>>, vector<8x1xf32>,
    %c0_18 = arith.constant 0 : index
    %c0_19 = arith.constant 0 : index
    %35 = vector.load %arg5[%c0_18, %c0_19] : memref<8x1xf32, #tpu.memory_space<vmem>>, vector<8x1xf32>
    tpu.vector_store %arg5[%c0_18, %c0_19], %23 {strides = array<i32>} : memref<8x1xf32, #tpu.memory_space<vmem>>, vector<8x1xf32>,
    %c0_i32_20 = arith.constant 0 : i32
    %36 = arith.cmpi eq, %arg1, %c0_i32_20 : i32
    %37 = arith.extui %36 : i1 to i32
    %c0_i32_21 = arith.constant 0 : i32
    %38 = arith.cmpi ne, %37, %c0_i32_21 : i32
    scf.if %38 {
      %c0_22 = arith.constant 0 : index
      %c0_23 = arith.constant 0 : index
      %39 = vector.load %arg5[%c0_22, %c0_23] : memref<8x1xf32, #tpu.memory_space<vmem>>, vector<8x1xf32>
      %c0_24 = arith.constant 0 : index
      %c0_25 = arith.constant 0 : index
      %40 = vector.load %arg6[%c0_24, %c0_25] : memref<8x1xf32, #tpu.memory_space<vmem>>, vector<8x1xf32>
      %41 = math.log %40 : vector<8x1xf32>
      %42 = arith.addf %39, %41 : vector<8x1xf32>
      %c0_26 = arith.constant 0 : index
      %c0_27 = arith.constant 0 : index
      %43 = vector.load %arg7[%c0_26, %c0_27] : memref<8x1xf32, #tpu.memory_space<vmem>>, vector<8x1xf32>
      %44 = arith.subf %42, %43 : vector<8x1xf32>
      %c-100_i32 = arith.constant -100 : i32
      %45 = vector.broadcast %c-100_i32 : i32 to vector<8x1xi32>
      %46 = arith.cmpi ne, %4, %45 : vector<8x1xi32>
      %cst_28 = arith.constant 0.000000e+00 : f32
      %47 = vector.broadcast %cst_28 : f32 to vector<8x1xf32>
      %48 = arith.select %46, %44, %47 : vector<8x1xi1>, vector<8x1xf32>
      %cst_29 = arith.constant dense<0.000000e+00> : vector<1xf32>
      %49 = vector.multi_reduction <add>, %48, %cst_29 [0] : vector<8x1xf32> to vector<1xf32>
      %50 = vector.shape_cast %49 : vector<1xf32> to vector<1x1xf32>
      %51 = vector.shape_cast %50 : vector<1x1xf32> to vector<1x1x1xf32>
      %c0_30 = arith.constant 0 : index
      %c0_31 = arith.constant 0 : index
      %c0_32 = arith.constant 0 : index
      %52 = vector.load %arg4[%c0_30, %c0_31, %c0_32] : memref<1x1x1xf32, #tpu.memory_space<vmem>>, vector<1x1x1xf32>
      tpu.vector_store %arg4[%c0_30, %c0_31, %c0_32], %51 {strides = array<i32>} : memref<1x1x1xf32, #tpu.memory_space<vmem>>, vector<1x1x1xf32>,
    } else {
    }
    return
  }
  func.func @transform_0(%arg0: i32, %arg1: i32) -> (i32, i32) {
    %c0_i32 = arith.constant 0 : i32
    return %arg0, %arg1 : i32, i32
  }
  func.func @transform_1(%arg0: i32, %arg1: i32) -> (i32, i32) {
    %c0_i32 = arith.constant 0 : i32
    %c0_i32_0 = arith.constant 0 : i32
    return %arg0, %c0_i32 : i32, i32
  }
  func.func @transform_2(%arg0: i32, %arg1: i32) -> (i32, i32, i32) {
    %c0_i32 = arith.constant 0 : i32
    %c0_i32_0 = arith.constant 0 : i32
    %c0_i32_1 = arith.constant 0 : i32
    return %arg0, %c0_i32, %c0_i32_0 : i32, i32, i32
  }
}

</mosaic_0001>

<llo_original>
// kernel: tpu_custom_call.1
$region0: #{tpu_custom_call.1}
  #allocation0 [shape = 'u32[]', space=smem, size = 0x4, offset = 0x4, fixed_abs, tag = 'smem constant byte address 0x4 - core index']
  #allocation1 [shape = 'u32[72,128]{1,0:T(1,128)}', space=vmem, size = 0x9000, scoped, tag = 'internal scratch']
  #allocation2 [shape = 'f32[8,1]{1,0:T(8,128)}', space=vmem, size = 0x1000, scoped, tag = 'scratch operand']
  #allocation3 [shape = 'f32[8,1]{1,0:T(8,128)}', space=vmem, size = 0x1000, scoped, tag = 'scratch operand']
  #allocation4 [shape = 'f32[8,1]{1,0:T(8,128)}', space=vmem, size = 0x1000, scoped, tag = 'scratch operand']
  %s0 = inlined_call_operand.vmem [shape: f32[16,32], index: 0, kind: input, shape index: {}]
  %s1 = inlined_call_operand.vmem [shape: s32[16,1], index: 1, kind: input, shape index: {}]
  %s2 = inlined_call_operand.vmem [shape: f32[2,1,1], index: 2, kind: output, shape index: {}]
  %s3 = sld [smem:[#allocation0]]
  $region49: #{tpu_custom_call.1} parent=0
    _
  %s5 = ssub.s32 1, %s3
  %s6 = scalar_select 0, %s5, %s3
  loop: start=0, step=1, limit=4
  $region2: #{tpu_custom_call.1} parent=0 // loop_pre_header
    _
  $region3: #{tpu_custom_call.1} parent=0 // loop_header
    %s8 = sphi 0, %s12
    %p9 = scmp.ge.s32.totalorder %s8, 4
    %s15 = sphi 0, %s27
    %s16 = sphi 0, %s23
    %s17 = sphi 0, %s15
    %s18 = sphi 0, %s16
    %s19 = sphi 0, %s17
    %s20 = sphi 0, %s18
    %s32 = sphi 0, %s34
    %s35 = sphi 0, %s32
    %s36 = sphi 0, %s35
    %s52 = sphi 0, %s36
    %s58 = sphi 0, %s60
    %s61 = sphi 0, %s58
    %s62 = sphi 0, %s61
    %s78 = sphi 0, %s62
    %s84 = sphi 0, %s86
    %s87 = sphi 0, %s84
    %s88 = sphi 0, %s87
    %s104 = sphi 0, %s88
  $region4: #{tpu_custom_call.1} parent=0 // loop_header_branch
    %11 = sbr.rel (%p9) target = $region8
  $region5: #{tpu_custom_call.1} parent=0 // loop_body
    %s13 = ssub.s32 %s8, 1
    %s14 = ssub.s32 %s8, 2
    %s21 = sadd.s32 1, %s16
    %p22 = scmp.ge.s32.totalorder %s21, 1
    %s23 = scalar_select %p22, 0, %s21
    %s24 = sadd.s32 1, %s15
    %s25 = scalar_select %p22, %s24, %s15
    %p26 = scmp.ge.s32.totalorder %s25, 2
    %s27 = scalar_select %p26, 0, %s25
    %s28 = ssub.s32 %s15, %s27
    %s29 = ssub.s32 %s16, %s23
    %s30 = sor.u32 %s28, %s29
    %p31 = scmp.eq.s32.totalorder %s30, 0
    %s33 = sadd.s32 %s32, 1
    %s34 = scalar_select %p31, %s32, %s33
    %p37 = pneg %p31
    %p38 = scmp.eq.s32.totalorder %s8, 1
    %p39 = por %p37, %p38
    %p40 = scmp.ne.s32.totalorder %s32, %s35
    %p41 = scmp.eq.s32.totalorder %s8, 0
    %p42 = por %p40, %p41
    %p43 = scmp.ne.s32.totalorder %s32, %s35
    %p44 = scmp.eq.s32.totalorder %s13, 1
    %p45 = por %p43, %p44
    %p46 = scmp.ne.s32.totalorder %s35, %s36
    %p47 = scmp.eq.s32.totalorder %s13, 0
    %p48 = por %p46, %p47
    %p49 = scmp.ne.s32.totalorder %s35, %s36
    %p50 = scmp.eq.s32.totalorder %s14, 1
    %p51 = por %p49, %p50
    %p53 = scmp.ne.s32.totalorder %s36, %s52
    %p54 = scmp.eq.s32.totalorder %s14, 0
    %p55 = por %p53, %p54
    %s56 = ssub.s32 %s15, %s27
    %p57 = scmp.eq.s32.totalorder %s56, 0
    %s59 = sadd.s32 %s58, 1
    %s60 = scalar_select %p57, %s58, %s59
    %p63 = pneg %p57
    %p64 = scmp.eq.s32.totalorder %s8, 1
    %p65 = por %p63, %p64
    %p66 = scmp.ne.s32.totalorder %s58, %s61
    %p67 = scmp.eq.s32.totalorder %s8, 0
    %p68 = por %p66, %p67
    %p69 = scmp.ne.s32.totalorder %s58, %s61
    %p70 = scmp.eq.s32.totalorder %s13, 1
    %p71 = por %p69, %p70
    %p72 = scmp.ne.s32.totalorder %s61, %s62
    %p73 = scmp.eq.s32.totalorder %s13, 0
    %p74 = por %p72, %p73
    %p75 = scmp.ne.s32.totalorder %s61, %s62
    %p76 = scmp.eq.s32.totalorder %s14, 1
    %p77 = por %p75, %p76
    %p79 = scmp.ne.s32.totalorder %s62, %s78
    %p80 = scmp.eq.s32.totalorder %s14, 0
    %p81 = por %p79, %p80
    %s82 = ssub.s32 %s15, %s27
    %p83 = scmp.eq.s32.totalorder %s82, 0
    %s85 = sadd.s32 %s84, 1
    %s86 = scalar_select %p83, %s84, %s85
    %p89 = pneg %p83
    %p90 = scmp.eq.s32.totalorder %s8, 1
    %p91 = por %p89, %p90
    %p92 = scmp.ne.s32.totalorder %s84, %s87
    %p93 = scmp.eq.s32.totalorder %s8, 0
    %p94 = por %p92, %p93
    %p95 = scmp.ne.s32.totalorder %s84, %s87
    %p96 = scmp.eq.s32.totalorder %s13, 1
    %p97 = por %p95, %p96
    %p98 = scmp.ne.s32.totalorder %s87, %s88
    %p99 = scmp.eq.s32.totalorder %s13, 0
    %p100 = por %p98, %p99
    %p101 = scmp.ne.s32.totalorder %s87, %s88
    %p102 = scmp.eq.s32.totalorder %s14, 1
    %p103 = por %p101, %p102
    %p105 = scmp.ne.s32.totalorder %s88, %s104
    %p106 = scmp.eq.s32.totalorder %s14, 0
    %p107 = por %p105, %p106
    %p108 = scmp.le.s32.totalorder 1, %s8
    %p109 = scmp.lt.s32.totalorder %s8, 3
    %p110 = pnand %p108, %p109
    %p111 = pneg %p110
    // Predicated region
    $region9: #{tpu_custom_call.1} parent=5 // pred_check
      _
    $region10: #{tpu_custom_call.1} parent=5 // pred_check_branch
      %113 = sbr.rel (%p110) target = $region12
    $region11: #{tpu_custom_call.1} parent=5 // pred_region
      %s114 = ssub.s32 %s8, 1
    $region12: #{tpu_custom_call.1} parent=5 // pred_fallthru
      _
    %p115 = scmp.lt.s32.totalorder %s8, 2
    // Predicated region
    $region13: #{tpu_custom_call.1} parent=5 // pred_check
      %p116 = pneg %p115
    $region14: #{tpu_custom_call.1} parent=5 // pred_check_branch
      %118 = sbr.rel (%p116) target = $region16
    $region15: #{tpu_custom_call.1} parent=5 // pred_region
      // Predicated region
      $region17: #{tpu_custom_call.1} parent=15 // pred_check
        %p119 = pneg %p42
      $region18: #{tpu_custom_call.1} parent=15 // pred_check_branch
        %121 = sbr.rel (%p119) target = $region20
      $region19: #{tpu_custom_call.1} parent=15 // pred_region
        %p122 = scmp.lt.s32.totalorder %s15, 1
        %s123 = scalar_select %p122, %s15, 1
        %p124 = scmp.lt.s32.totalorder %s16, 0
        %s125 = scalar_select %p124, %s16, 0
        %s126 = sadd.s32 %s125, %s123
        %s127 = smul.addr %s126, 8
        %s128 = scalar_lea.vmem %s0, %s127
      $region20: #{tpu_custom_call.1} parent=15 // pred_fallthru
        _
      // Predicated region
      $region21: #{tpu_custom_call.1} parent=15 // pred_check
        %p129 = pneg %p68
      $region22: #{tpu_custom_call.1} parent=15 // pred_check_branch
        %131 = sbr.rel (%p129) target = $region24
      $region23: #{tpu_custom_call.1} parent=15 // pred_region
        %p132 = scmp.lt.s32.totalorder %s15, 1
        %s133 = scalar_select %p132, %s15, 1
        %s134 = smul.addr %s133, 8
        %s135 = scalar_lea.vmem %s1, %s134
      $region24: #{tpu_custom_call.1} parent=15 // pred_fallthru
        _
    $region16: #{tpu_custom_call.1} parent=5 // pred_fallthru
      _
    %p136 = scmp.le.s32.totalorder 1, %s8
    %p137 = scmp.lt.s32.totalorder %s8, 3
    %p138 = pnand %p136, %p137
    %p139 = pneg %p138
    // Predicated region
    $region25: #{tpu_custom_call.1} parent=5 // pred_check
      _
    $region26: #{tpu_custom_call.1} parent=5 // pred_check_branch
      %141 = sbr.rel (%p138) target = $region28
    $region27: #{tpu_custom_call.1} parent=5 // pred_region
      %s142 = ssub.s32 %s8, 1
      %p143 = scmp.lt.s32.totalorder %s17, 1
      %s144 = scalar_select %p143, %s17, 1
      %p145 = scmp.lt.s32.totalorder %s18, 0
      %s146 = scalar_select %p145, %s18, 0
      %s147 = sadd.s32 %s146, %s144
      %s148 = smul.addr %s147, 8
      %s149 = scalar_lea.vmem %s0, %s148
      %p150 = pneg %p48
      %p151 = pneg %p45
      %p152 = scmp.lt.s32.totalorder %s17, 1
      %s153 = scalar_select %p152, %s17, 1
      %s154 = smul.addr %s153, 8
      %s155 = scalar_lea.vmem %s1, %s154
      %p156 = pneg %p74
      %p157 = pneg %p71
      %p158 = pneg %p100
      %p159 = pneg %p97
      %p160 = scmp.lt.s32.totalorder %s17, 1
      %s161 = scalar_select %p160, %s17, 1
      %s162 = scalar_lea.vmem %s2, %s161
      %p163 = scmp.lt.s32.totalorder %s17, 1
      %s164 = scalar_select %p163, %s17, 1
      %p165 = scmp.lt.s32.totalorder %s18, 0
      %s166 = scalar_select %p165, %s18, 0
      %s167 = sadd.s32 %s166, %s164
      %s168 = smul.addr %s167, 8
      %s169 = scalar_lea.vmem %s0, %s168
      %p170 = scmp.lt.s32.totalorder %s17, 1
      %s171 = scalar_select %p170, %s17, 1
      %s172 = smul.addr %s171, 8
      %s173 = scalar_lea.vmem %s1, %s172
      %p174 = scmp.lt.s32.totalorder %s17, 1
      %s175 = scalar_select %p174, %s17, 1
      %s176 = scalar_lea.vmem %s2, %s175
      %p177 = scmp.eq.s32.totalorder %s18, 0
      // Predicated region
      $region29: #{tpu_custom_call.1} parent=27 // pred_check
        %p178 = pneg %p177
      $region30: #{tpu_custom_call.1} parent=27 // pred_check_branch
        %180 = sbr.rel (%p178) target = $region32
      $region31: #{tpu_custom_call.1} parent=27 // pred_region
        %vm181 = vcmask 7168
        %182 = vst.msk [vmem:[#allocation2] sm:$0xff] %vm181, -inf
        %183 = vst.msk [vmem:[#allocation3] sm:$0xff] %vm181, 0.0
        %184 = vst.msk [vmem:[#allocation4] sm:$0xff] %vm181, 0.0
      $region32: #{tpu_custom_call.1} parent=27 // pred_fallthru
        _
      %v185 = vld [vmem:[%s169] sm:$0xff]
      %v186 = vld [vmem:[%s173] sm:$0xff]
      %v187 = vlaneseq
      %v188 = vand.u32 %v187, 127
      %s189 = smul.u32 %s18, 32
      %v190 = vstv %s189
      %v191 = vadd.s32 %v188, %v190
      %192 = vset.pattern.permute.xlu0 0
      %193 = vperm.xlu0 %192, %v186
      %v194 = vpop.permute.xlu0 %193
      %vm195 = vcmp.eq.s32.totalorder %v191, %v194
      %v196 = vsel %vm195, 0.9, 0.0032258064
      %v197 = vld [vmem:[#allocation4] sm:$0xff]
      %v198 = vmul.f32 %v196, %v185
      %vm199 = vcmask 261120
      %v200 = vsel %vm199, %v198, 0.0
      %201 = vadd.xlane.f32.xlu0 %v200
      %v202 = vpop.xlane.xlu0 %201
      %v203 = vadd.f32 %v197, %v202
      %vm204 = vcmask 7168
      %205 = vst.msk [vmem:[#allocation4] sm:$0xff] %vm204, %v203
      %v206 = vsel %vm199, %v185, -inf
      %207 = vmax.xlane.f32.xlu0 %v206
      %v208 = vpop.xlane.xlu0 %207
      %v209 = vld [vmem:[#allocation2] sm:$0xff]
      %v210 = vmax.f32 %v209, %v208
      %212 = vset.pattern.permute.xlu0 0
      %213 = vperm.xlu0 %212, %v210
      %v214 = vpop.permute.xlu0 %213
      %v216 = vsub.f32 %v185, %v214
      %v217 = vmul.f32 %v216, 1.442695
      %v218 = vpow.pop %v217
      %v219 = vsub.f32 %v209, %v210
      %v220 = vmul.f32 %v219, 1.442695
      %v221 = vpow.pop %v220
      %v222 = vld [vmem:[#allocation3] sm:$0xff]
      %v223 = vmul.f32 %v221, %v222
      %v224 = vsel %vm199, %v218, 0.0
      %225 = vadd.xlane.f32.xlu0 %v224
      %v226 = vpop.xlane.xlu0 %225
      %v227 = vadd.f32 %v223, %v226
      %228 = vst.msk [vmem:[#allocation3] sm:$0xff] %vm204, %v227
      %229 = vst.msk [vmem:[#allocation2] sm:$0xff] %vm204, %v210
      // Predicated region
      $region33: #{tpu_custom_call.1} parent=27 // pred_check
        %p230 = pneg %p177
      $region34: #{tpu_custom_call.1} parent=27 // pred_check_branch
        %232 = sbr.rel (%p230) target = $region36
      $region35: #{tpu_custom_call.1} parent=27 // pred_region
        %v233 = vld [vmem:[#allocation2] sm:$0xff]
        %v234 = vld [vmem:[#allocation3] sm:$0xff]
        %v235 = vlog2.pop %v234
        %v236 = vmul.f32 %v235, 0.6931472
        %v237 = vadd.f32 %v233, %v236
        %v238 = vld [vmem:[#allocation4] sm:$0xff]
        %v239 = vsub.f32 %v237, %v238
        %vm240 = vcmp.ne.s32.totalorder %v186, 4294967196
        %v241 = vsel %vm240, %v239, 0.0
        %v242 = vsel %vm204, %v241, 0.0
        %v243 = vrot.slane %v242, 4
        %v244 = vadd.f32 %v242, %v243
        %v245 = vrot.slane %v244, 2
        %v246 = vadd.f32 %v244, %v245
        %v247 = vrot.slane %v246, 1
        %v248 = vadd.f32 %v246, %v247
        %vm249 = vcmask 0
        %250 = vst.msk [vmem:[%s176] sm:$0x1] %vm249, %v248
      $region36: #{tpu_custom_call.1} parent=27 // pred_fallthru
        _
      %p251 = scmp.lt.s32.totalorder %s17, 1
      %s252 = scalar_select %p251, %s17, 1
      %s253 = scalar_lea.vmem %s2, %s252
      // Predicated region
      $region37: #{tpu_custom_call.1} parent=27 // pred_check
        %p254 = pneg %p97
      $region38: #{tpu_custom_call.1} parent=27 // pred_check_branch
        %256 = sbr.rel (%p254) target = $region40
      $region39: #{tpu_custom_call.1} parent=27 // pred_region
        _
      $region40: #{tpu_custom_call.1} parent=27 // pred_fallthru
        _
    $region28: #{tpu_custom_call.1} parent=5 // pred_fallthru
      _
    %p257 = scmp.le.s32.totalorder 2, %s8
    // Predicated region
    $region41: #{tpu_custom_call.1} parent=5 // pred_check
      %p258 = pneg %p257
    $region42: #{tpu_custom_call.1} parent=5 // pred_check_branch
      %260 = sbr.rel (%p258) target = $region44
    $region43: #{tpu_custom_call.1} parent=5 // pred_region
      %s261 = ssub.s32 %s8, 2
      // Predicated region
      $region45: #{tpu_custom_call.1} parent=43 // pred_check
        %p262 = pneg %p103
      $region46: #{tpu_custom_call.1} parent=43 // pred_check_branch
        %264 = sbr.rel (%p262) target = $region48
      $region47: #{tpu_custom_call.1} parent=43 // pred_region
        %p265 = scmp.lt.s32.totalorder %s19, 1
        %s266 = scalar_select %p265, %s19, 1
        %s267 = scalar_lea.vmem %s2, %s266
      $region48: #{tpu_custom_call.1} parent=43 // pred_fallthru
        _
    $region44: #{tpu_custom_call.1} parent=5 // pred_fallthru
      _
  $region6: #{tpu_custom_call.1} parent=0 // loop_footer
    %s12 = sadd.s32 1, %s8
  $region7: #{tpu_custom_call.1} parent=0 // loop_footer_branch
    %7 = sbr.rel target = $region3
  $region8: #{tpu_custom_call.1} parent=0 // loop_exit
    _

</llo_original>
